<compile_context>
chip_gen: v5e
topology: v5e:2x2
jax: 0.10.0
libtpu: 0.0.40
codegen_flags: <defaults>
</compile_context>

<pallas_src>
import jax
import jax.numpy as jnp
from jax.experimental import pallas as pl
from jax.experimental.pallas import tpu as pltpu

LEAKY_SLOPE = 0.01  # PyTorch nn.LeakyReLU default
BN_EPS = 1e-5       # PyTorch nn.BatchNorm1d default
LANE = 128
SUBLANE = 8


def _leaky_relu(x):
    return jnp.where(x > 0, x, LEAKY_SLOPE * x)


def _round_up(n, m):
    return ((n + m - 1) // m) * m


# --------------------------------- kernel ------------------------------------

def tab_resnet_decoder_kernel(
    x_ref,
    # block 0 (identity shortcut); BN + bias folded into (W, t)
    w1a_ref, t1a_ref, w2a_ref, t2a_ref,
    # block 1 (resize shortcut); lin1 and resize concatenated along N
    wcat_ref, tcat_ref, w2b_ref, t2b_ref,
    # reconstruction layer (no bias)
    wrec_ref,
    out_ref,
):
    cdt = w1a_ref.dtype                 # streamed / MXU-input dtype (bf16)
    x = x_ref[...]
    x_f = x.astype(jnp.float32)

    # ----- block 0: identity shortcut -----
    h = jnp.dot(x.astype(cdt), w1a_ref[...],
                preferred_element_type=jnp.float32) + t1a_ref[...]
    h = _leaky_relu(h)                  # dropout: identity (eval)
    h = jnp.dot(h.astype(cdt), w2a_ref[...],
                preferred_element_type=jnp.float32) + t2a_ref[...]
    h = _leaky_relu(h + x_f)

    # ----- block 1: [lin1 | resize] fused into one matmul over the shared LHS -----
    d2p = w2b_ref.shape[0]              # static padded D2
    z = jnp.dot(h.astype(cdt), wcat_ref[...],
                preferred_element_type=jnp.float32) + tcat_ref[...]
    g = _leaky_relu(z[:, :d2p])
    identity = z[:, d2p:]
    g = jnp.dot(g.astype(cdt), w2b_ref[...],
                preferred_element_type=jnp.float32) + t2b_ref[...]
    g = _leaky_relu(g + identity)

    # ----- reconstruction layer (no bias) -----
    out_ref[...] = jnp.dot(g.astype(cdt), wrec_ref[...],
                           preferred_element_type=jnp.float32).astype(out_ref.dtype)


# ------------------------------ host-side glue --------------------------------

def _fold_bn_into_linear(w, b, bn):
    """BN(z) with running stats folded into a preceding Linear (exact in eval)."""
    gamma, beta, mean, var = bn
    scale = gamma / jnp.sqrt(var + BN_EPS)
    w_f = w * scale[None, :]
    t_f = b * scale + (beta - mean * scale)
    return w_f, t_f


def _pad2(a, rows, cols):
    out = jnp.zeros((rows, cols), a.dtype)
    return out.at[: a.shape[0], : a.shape[1]].set(a)


def _pad_row(v, cols):
    out = jnp.zeros((1, cols), v.dtype)
    return out.at[0, : v.shape[0]].set(v)


def prepare_decoder_params(params, *, stream_dtype=jnp.bfloat16):
    """Fold BN+bias, fuse [lin1|resize], zero-pad to 128-multiples, cast to bf16.

    Call once per set of weights and reuse the result for every forward call
    (hoists ~10 small XLA ops + their HBM round trips out of the serving path).
    Biases stay f32 (added after the f32-accumulating dot).
    """
    b0, b1 = params["b0"], params["b1"]
    D0 = b0["w1"].shape[0]
    D1 = b0["w1"].shape[1]
    D2 = b1["w1"].shape[1]
    E = params["wrec"].shape[1]
    assert D0 == D1, (
        "first DenseResnet block assumed non-resizing (blocks_dims[0] == blocks_dims[1])"
    )

    D0p = _round_up(D0, LANE)
    D2p = _round_up(D2, LANE)
    Ep = _round_up(E, LANE)

    w1a, t1a = _fold_bn_into_linear(b0["w1"], b0["b1"], b0["bn1"])
    w2a, t2a = _fold_bn_into_linear(b0["w2"], b0["b2"], b0["bn2"])
    w1b, t1b = _fold_bn_into_linear(b1["w1"], b1["b1"], b1["bn1"])
    w2b, t2b = _fold_bn_into_linear(b1["w2"], b1["b2"], b1["bn2"])
    wr, tr = _fold_bn_into_linear(b1["wr"], b1["br"], b1["bnr"])

    def wpad(a, r, c):
        return _pad2(a, r, c).astype(stream_dtype)

    weights = (
        wpad(w1a, D0p, D0p), _pad_row(t1a, D0p),
        wpad(w2a, D0p, D0p), _pad_row(t2a, D0p),
        jnp.concatenate([wpad(w1b, D0p, D2p), wpad(wr, D0p, D2p)], axis=1),
        jnp.concatenate([_pad_row(t1b, D2p), _pad_row(tr, D2p)], axis=1),
        wpad(w2b, D2p, D2p), _pad_row(t2b, D2p),
        wpad(params["wrec"], D2p, Ep),
    )
    return {"weights": weights, "D0": D0, "D0p": D0p, "E": E, "Ep": Ep,
            "stream_dtype": stream_dtype}


def _select_batch_tile(B, batch_tile):
    """Batch tile: multiple of 8 sublanes, large by default (amortizes the
    ~0.35us/grid-step overhead), shrunk so the 'parallel' batch axis has at
    least 2 grid steps whenever possible (v7x has 2 TensorCores)."""
    if batch_tile is None:
        batch_tile = 1024
    tb = _round_up(min(batch_tile, B), SUBLANE)
    if B > SUBLANE and pl.cdiv(B, tb) < 2:
        tb = _round_up(pl.cdiv(B, 2), SUBLANE)
    return max(tb, SUBLANE)


def tab_resnet_decoder_apply(x, prepared, *, batch_tile=None):
    """x: (B, D0) -> (B, embed_dim) float32, using prepared (folded) weights."""
    weights = prepared["weights"]
    D0, D0p, E, Ep = prepared["D0"], prepared["D0p"], prepared["E"], prepared["Ep"]
    sdt = prepared["stream_dtype"]

    B, d0 = x.shape
    assert d0 == D0, "feature dim mismatch vs prepared weights"

    tb = _select_batch_tile(B, batch_tile)
    Br = max(B, SUBLANE)  # keep at least one full sublane of rows

    # Stream x.  Only touch it on the host when the feature dim needs lane
    # padding (then the bf16 cast rides the same single pass); otherwise hand
    # it to the kernel as-is and cast per-tile in VMEM (no extra HBM pass).
    if D0p != D0 or Br != B:
        x_in = jnp.zeros((Br, D0p), sdt).at[:B, :D0].set(x.astype(sdt))
    else:
        x_in = x

    def const_spec(a):
        # constant index_map: weights stay VMEM-resident across batch tiles
        return pl.BlockSpec(a.shape, lambda i: (0, 0))

    grid = (pl.cdiv(Br, tb),)  # partial last block: reads/writes are masked

    out = pl.pallas_call(
        tab_resnet_decoder_kernel,
        out_shape=jax.ShapeDtypeStruct((Br, Ep), jnp.float32),
        grid_spec=pltpu.PrefetchScalarGridSpec(
            num_scalar_prefetch=0,
            grid=grid,
            in_specs=[pl.BlockSpec((tb, x_in.shape[1]), lambda i: (i, 0))]
                     + [const_spec(a) for a in weights],
            out_specs=pl.BlockSpec((tb, Ep), lambda i: (i, 0)),
        ),
        compiler_params=pltpu.CompilerParams(
            dimension_semantics=("parallel",),      # megacore / v7x 2-TC sharding
            vmem_limit_bytes=48 * 1024 * 1024,       # explicit, safe on all gens
        ),
    )(x_in, *weights)

    if Br != B or Ep != E:
        out = out[:B, :E]
    return out


def tab_resnet_decoder(x, params, *, batch_tile=None, stream_dtype=jnp.bfloat16):
    """Convenience one-shot wrapper (prepare + apply)."""
    prepared = prepare_decoder_params(params, stream_dtype=stream_dtype)
    return tab_resnet_decoder_apply(x, prepared, batch_tile=batch_tile)


# ----------------------- parameter construction (demo) ------------------------

def _linear_params(key, fan_in, fan_out, bias=True):
    kw, kb = jax.random.split(key)
    bound = 1.0 / jnp.sqrt(fan_in)
    w = jax.random.uniform(kw, (fan_in, fan_out), jnp.float32, -bound, bound)
    b = (jax.random.uniform(kb, (fan_out,), jnp.float32, -bound, bound)
         if bias else jnp.zeros((fan_out,), jnp.float32))
    return w, b


def _bn_params(key, dim):
    k1, k2, k3, k4 = jax.random.split(key, 4)
    gamma = jax.random.uniform(k1, (dim,), jnp.float32, 0.5, 1.5)
    beta = 0.1 * jax.random.normal(k2, (dim,), jnp.float32)
    running_mean = 0.1 * jax.random.normal(k3, (dim,), jnp.float32)
    running_var = jax.random.uniform(k4, (dim,), jnp.float32, 0.5, 1.5)
    return gamma, beta, running_mean, running_var


def make_params(key, blocks_dims, embed_dim):
    D0, D1, D2 = blocks_dims
    keys = jax.random.split(key, 16)
    w1a, b1a = _linear_params(keys[0], D0, D1)
    w2a, b2a = _linear_params(keys[1], D1, D1)
    w1b, b1b = _linear_params(keys[2], D1, D2)
    w2b, b2b = _linear_params(keys[3], D2, D2)
    wr, br = _linear_params(keys[4], D1, D2)
    wrec, _ = _linear_params(keys[5], D2, embed_dim, bias=False)
    return {
        "b0": {"w1": w1a, "b1": b1a, "bn1": _bn_params(keys[6], D1),
               "w2": w2a, "b2": b2a, "bn2": _bn_params(keys[7], D1)},
        "b1": {"w1": w1b, "b1": b1b, "bn1": _bn_params(keys[8], D2),
               "w2": w2b, "b2": b2b, "bn2": _bn_params(keys[9], D2),
               "wr": wr, "br": br, "bnr": _bn_params(keys[10], D2)},
        "wrec": wrec,
    }


# ------------------------------ pure-JAX reference ----------------------------

def reference_forward(x, params):
    """Faithful (unfolded, f32) eval-mode forward matching the PyTorch module."""
    def bn(z, p):
        g, b, m, v = p
        return (z - m) / jnp.sqrt(v + BN_EPS) * g + b

    b0, b1 = params["b0"], params["b1"]
    h = _leaky_relu(bn(x @ b0["w1"] + b0["b1"], b0["bn1"]))
    h = bn(h @ b0["w2"] + b0["b2"], b0["bn2"])
    h = _leaky_relu(h + x)
    ident = bn(h @ b1["wr"] + b1["br"], b1["bnr"])
    g = _leaky_relu(bn(h @ b1["w1"] + b1["b1"], b1["bn1"]))
    g = bn(g @ b1["w2"] + b1["b2"], b1["bn2"])
    g = _leaky_relu(g + ident)
    return g @ params["wrec"]


if __name__ == "__main__":
    # Small config mirroring the default blocks_dims pattern [100, 100, 200]
    blocks_dims = [32, 32, 64]
    embed_dim = 48
    batch = 20            # not a tile multiple -> exercises masked partial block

    key = jax.random.PRNGKey(0)
    kx, kp = jax.random.split(key)
    x = jax.random.normal(kx, (batch, blocks_dims[0]), jnp.float32)
    params = make_params(kp, blocks_dims, embed_dim)

    # Fold/pad/cast the weights once; reuse for every forward call.
    prepared = prepare_decoder_params(params)

    # Default tiling: exercises the ">= 2 grid steps" rule (grid=(2,)).
    out_a = jax.block_until_ready(tab_resnet_decoder_apply(x, prepared))
    # Small explicit tile: grid=(3,) with a partial last block (masked writeback).
    out_b = jax.block_until_ready(tab_resnet_decoder_apply(x, prepared, batch_tile=8))

    ref = reference_forward(x, params)
    assert out_a.shape == (batch, embed_dim)
    assert out_b.shape == (batch, embed_dim)
    # bf16-streamed weights/activations with f32 accumulation: ~1e-2 relative
    # error vs the unfolded f32 reference is expected; real bugs are O(0.1-1).
    assert jnp.allclose(out_a, ref, atol=5e-2, rtol=5e-2), "mismatch vs JAX reference"
    assert jnp.allclose(out_b, ref, atol=5e-2, rtol=5e-2), "mismatch vs JAX reference"

    print("KERNEL_OK")
</pallas_src>

<mosaic_0001>
module attributes {stable_mosaic.version = 11 : i64} {
  func.func @tab_resnet_decoder_kernel(%arg0: i32, %arg1: memref<16x128xbf16, #tpu.memory_space<vmem>>, %arg2: memref<128x128xbf16, #tpu.memory_space<vmem>>, %arg3: memref<1x128xf32, #tpu.memory_space<vmem>>, %arg4: memref<128x128xbf16, #tpu.memory_space<vmem>>, %arg5: memref<1x128xf32, #tpu.memory_space<vmem>>, %arg6: memref<128x256xbf16, #tpu.memory_space<vmem>>, %arg7: memref<1x256xf32, #tpu.memory_space<vmem>>, %arg8: memref<128x128xbf16, #tpu.memory_space<vmem>>, %arg9: memref<1x128xf32, #tpu.memory_space<vmem>>, %arg10: memref<128x128xbf16, #tpu.memory_space<vmem>>, %arg11: memref<16x128xf32, #tpu.memory_space<vmem>>) attributes {dimension_semantics = [#tpu.dimension_semantics<parallel>], iteration_bounds = array<i64: 2>, scalar_prefetch = 0 : i64, scratch_operands = 0 : i64, tpu.core_type = #tpu.core_type<tc>, window_params = [{transform_indices = @transform_0, window_bounds = array<i64: 16, 128>}, {pipeline_mode = #tpu.pipeline_mode<synchronous>, transform_indices = @transform_1, window_bounds = array<i64: 128, 128>}, {pipeline_mode = #tpu.pipeline_mode<synchronous>, transform_indices = @transform_2, window_bounds = array<i64: 1, 128>}, {pipeline_mode = #tpu.pipeline_mode<synchronous>, transform_indices = @transform_3, window_bounds = array<i64: 128, 128>}, {pipeline_mode = #tpu.pipeline_mode<synchronous>, transform_indices = @transform_4, window_bounds = array<i64: 1, 128>}, {pipeline_mode = #tpu.pipeline_mode<synchronous>, transform_indices = @transform_5, window_bounds = array<i64: 128, 256>}, {pipeline_mode = #tpu.pipeline_mode<synchronous>, transform_indices = @transform_6, window_bounds = array<i64: 1, 256>}, {pipeline_mode = #tpu.pipeline_mode<synchronous>, transform_indices = @transform_7, window_bounds = array<i64: 128, 128>}, {pipeline_mode = #tpu.pipeline_mode<synchronous>, transform_indices = @transform_8, window_bounds = array<i64: 1, 128>}, {pipeline_mode = #tpu.pipeline_mode<synchronous>, transform_indices = @transform_9, window_bounds = array<i64: 128, 128>}, {transform_indices = @transform_10, window_bounds = array<i64: 16, 128>}]} {
    %c0 = arith.constant 0 : index
    %c0_0 = arith.constant 0 : index
    %0 = vector.load %arg1[%c0, %c0_0] : memref<16x128xbf16, #tpu.memory_space<vmem>>, vector<16x128xbf16>
    %1 = arith.extf %0 : vector<16x128xbf16> to vector<16x128xf32>
    %c0_1 = arith.constant 0 : index
    %c0_2 = arith.constant 0 : index
    %2 = vector.load %arg2[%c0_1, %c0_2] : memref<128x128xbf16, #tpu.memory_space<vmem>>, vector<128x128xbf16>
    %cst = arith.constant dense<0.000000e+00> : vector<16x128xf32>
    %3 = tpu.matmul %0, %2, %cst {dimension_numbers = #tpu.dot_dimension_numbers<[1], [0], [0], [1], [0, 0, 1, 1], [], []>} : vector<16x128xbf16>, vector<128x128xbf16>, vector<16x128xf32> -> vector<16x128xf32>
    %c0_3 = arith.constant 0 : index
    %c0_4 = arith.constant 0 : index
    %4 = vector.load %arg3[%c0_3, %c0_4] : memref<1x128xf32, #tpu.memory_space<vmem>>, vector<1x128xf32>
    %5 = vector.broadcast %4 : vector<1x128xf32> to vector<16x128xf32>
    %6 = arith.addf %3, %5 : vector<16x128xf32>
    %cst_5 = arith.constant 0.000000e+00 : f32
    %7 = vector.broadcast %cst_5 : f32 to vector<16x128xf32>
    %8 = arith.cmpf ogt, %6, %7 : vector<16x128xf32>
    %cst_6 = arith.constant 0.00999999977 : f32
    %9 = vector.broadcast %cst_6 : f32 to vector<16x128xf32>
    %10 = arith.mulf %9, %6 : vector<16x128xf32>
    %11 = arith.select %8, %6, %10 : vector<16x128xi1>, vector<16x128xf32>
    %12 = arith.truncf %11 : vector<16x128xf32> to vector<16x128xbf16>
    %c0_7 = arith.constant 0 : index
    %c0_8 = arith.constant 0 : index
    %13 = vector.load %arg4[%c0_7, %c0_8] : memref<128x128xbf16, #tpu.memory_space<vmem>>, vector<128x128xbf16>
    %cst_9 = arith.constant dense<0.000000e+00> : vector<16x128xf32>
    %14 = tpu.matmul %12, %13, %cst_9 {dimension_numbers = #tpu.dot_dimension_numbers<[1], [0], [0], [1], [0, 0, 1, 1], [], []>} : vector<16x128xbf16>, vector<128x128xbf16>, vector<16x128xf32> -> vector<16x128xf32>
    %c0_10 = arith.constant 0 : index
    %c0_11 = arith.constant 0 : index
    %15 = vector.load %arg5[%c0_10, %c0_11] : memref<1x128xf32, #tpu.memory_space<vmem>>, vector<1x128xf32>
    %16 = vector.broadcast %15 : vector<1x128xf32> to vector<16x128xf32>
    %17 = arith.addf %14, %16 : vector<16x128xf32>
    %18 = arith.addf %17, %1 : vector<16x128xf32>
    %cst_12 = arith.constant 0.000000e+00 : f32
    %19 = vector.broadcast %cst_12 : f32 to vector<16x128xf32>
    %20 = arith.cmpf ogt, %18, %19 : vector<16x128xf32>
    %cst_13 = arith.constant 0.00999999977 : f32
    %21 = vector.broadcast %cst_13 : f32 to vector<16x128xf32>
    %22 = arith.mulf %21, %18 : vector<16x128xf32>
    %23 = arith.select %20, %18, %22 : vector<16x128xi1>, vector<16x128xf32>
    %24 = arith.truncf %23 : vector<16x128xf32> to vector<16x128xbf16>
    %c0_14 = arith.constant 0 : index
    %c0_15 = arith.constant 0 : index
    %25 = vector.load %arg6[%c0_14, %c0_15] : memref<128x256xbf16, #tpu.memory_space<vmem>>, vector<128x256xbf16>
    %cst_16 = arith.constant dense<0.000000e+00> : vector<16x256xf32>
    %26 = tpu.matmul %24, %25, %cst_16 {dimension_numbers = #tpu.dot_dimension_numbers<[1], [0], [0], [1], [0, 0, 1, 1], [], []>} : vector<16x128xbf16>, vector<128x256xbf16>, vector<16x256xf32> -> vector<16x256xf32>
    %c0_17 = arith.constant 0 : index
    %c0_18 = arith.constant 0 : index
    %27 = vector.load %arg7[%c0_17, %c0_18] : memref<1x256xf32, #tpu.memory_space<vmem>>, vector<1x256xf32>
    %28 = vector.broadcast %27 : vector<1x256xf32> to vector<16x256xf32>
    %29 = arith.addf %26, %28 : vector<16x256xf32>
    %30 = vector.extract_strided_slice %29 {offsets = [0, 0], sizes = [16, 128], strides = [1, 1]} : vector<16x256xf32> to vector<16x128xf32>
    %cst_19 = arith.constant 0.000000e+00 : f32
    %31 = vector.broadcast %cst_19 : f32 to vector<16x128xf32>
    %32 = arith.cmpf ogt, %30, %31 : vector<16x128xf32>
    %cst_20 = arith.constant 0.00999999977 : f32
    %33 = vector.broadcast %cst_20 : f32 to vector<16x128xf32>
    %34 = arith.mulf %33, %30 : vector<16x128xf32>
    %35 = arith.select %32, %30, %34 : vector<16x128xi1>, vector<16x128xf32>
    %36 = vector.extract_strided_slice %29 {offsets = [0, 128], sizes = [16, 128], strides = [1, 1]} : vector<16x256xf32> to vector<16x128xf32>
    %37 = arith.truncf %35 : vector<16x128xf32> to vector<16x128xbf16>
    %c0_21 = arith.constant 0 : index
    %c0_22 = arith.constant 0 : index
    %38 = vector.load %arg8[%c0_21, %c0_22] : memref<128x128xbf16, #tpu.memory_space<vmem>>, vector<128x128xbf16>
    %cst_23 = arith.constant dense<0.000000e+00> : vector<16x128xf32>
    %39 = tpu.matmul %37, %38, %cst_23 {dimension_numbers = #tpu.dot_dimension_numbers<[1], [0], [0], [1], [0, 0, 1, 1], [], []>} : vector<16x128xbf16>, vector<128x128xbf16>, vector<16x128xf32> -> vector<16x128xf32>
    %c0_24 = arith.constant 0 : index
    %c0_25 = arith.constant 0 : index
    %40 = vector.load %arg9[%c0_24, %c0_25] : memref<1x128xf32, #tpu.memory_space<vmem>>, vector<1x128xf32>
    %41 = vector.broadcast %40 : vector<1x128xf32> to vector<16x128xf32>
    %42 = arith.addf %39, %41 : vector<16x128xf32>
    %43 = arith.addf %42, %36 : vector<16x128xf32>
    %cst_26 = arith.constant 0.000000e+00 : f32
    %44 = vector.broadcast %cst_26 : f32 to vector<16x128xf32>
    %45 = arith.cmpf ogt, %43, %44 : vector<16x128xf32>
    %cst_27 = arith.constant 0.00999999977 : f32
    %46 = vector.broadcast %cst_27 : f32 to vector<16x128xf32>
    %47 = arith.mulf %46, %43 : vector<16x128xf32>
    %48 = arith.select %45, %43, %47 : vector<16x128xi1>, vector<16x128xf32>
    %49 = arith.truncf %48 : vector<16x128xf32> to vector<16x128xbf16>
    %c0_28 = arith.constant 0 : index
    %c0_29 = arith.constant 0 : index
    %50 = vector.load %arg10[%c0_28, %c0_29] : memref<128x128xbf16, #tpu.memory_space<vmem>>, vector<128x128xbf16>
    %cst_30 = arith.constant dense<0.000000e+00> : vector<16x128xf32>
    %51 = tpu.matmul %49, %50, %cst_30 {dimension_numbers = #tpu.dot_dimension_numbers<[1], [0], [0], [1], [0, 0, 1, 1], [], []>} : vector<16x128xbf16>, vector<128x128xbf16>, vector<16x128xf32> -> vector<16x128xf32>
    %c0_31 = arith.constant 0 : index
    %c0_32 = arith.constant 0 : index
    %52 = vector.load %arg11[%c0_31, %c0_32] : memref<16x128xf32, #tpu.memory_space<vmem>>, vector<16x128xf32>
    tpu.vector_store %arg11[%c0_31, %c0_32], %51 {strides = array<i32>} : memref<16x128xf32, #tpu.memory_space<vmem>>, vector<16x128xf32>,
    return
  }
  func.func @transform_0(%arg0: i32) -> (i32, i32) {
    %c0_i32 = arith.constant 0 : i32
    %c0_i32_0 = arith.constant 0 : i32
    return %arg0, %c0_i32 : i32, i32
  }
  func.func @transform_1(%arg0: i32) -> (i32, i32) {
    %c0_i32 = arith.constant 0 : i32
    %c0_i32_0 = arith.constant 0 : i32
    %c0_i32_1 = arith.constant 0 : i32
    return %c0_i32, %c0_i32_0 : i32, i32
  }
  func.func @transform_2(%arg0: i32) -> (i32, i32) {
    %c0_i32 = arith.constant 0 : i32
    %c0_i32_0 = arith.constant 0 : i32
    %c0_i32_1 = arith.constant 0 : i32
    return %c0_i32, %c0_i32_0 : i32, i32
  }
  func.func @transform_3(%arg0: i32) -> (i32, i32) {
    %c0_i32 = arith.constant 0 : i32
    %c0_i32_0 = arith.constant 0 : i32
    %c0_i32_1 = arith.constant 0 : i32
    return %c0_i32, %c0_i32_0 : i32, i32
  }
  func.func @transform_4(%arg0: i32) -> (i32, i32) {
    %c0_i32 = arith.constant 0 : i32
    %c0_i32_0 = arith.constant 0 : i32
    %c0_i32_1 = arith.constant 0 : i32
    return %c0_i32, %c0_i32_0 : i32, i32
  }
  func.func @transform_5(%arg0: i32) -> (i32, i32) {
    %c0_i32 = arith.constant 0 : i32
    %c0_i32_0 = arith.constant 0 : i32
    %c0_i32_1 = arith.constant 0 : i32
    return %c0_i32, %c0_i32_0 : i32, i32
  }
  func.func @transform_6(%arg0: i32) -> (i32, i32) {
    %c0_i32 = arith.constant 0 : i32
    %c0_i32_0 = arith.constant 0 : i32
    %c0_i32_1 = arith.constant 0 : i32
    return %c0_i32, %c0_i32_0 : i32, i32
  }
  func.func @transform_7(%arg0: i32) -> (i32, i32) {
    %c0_i32 = arith.constant 0 : i32
    %c0_i32_0 = arith.constant 0 : i32
    %c0_i32_1 = arith.constant 0 : i32
    return %c0_i32, %c0_i32_0 : i32, i32
  }
  func.func @transform_8(%arg0: i32) -> (i32, i32) {
    %c0_i32 = arith.constant 0 : i32
    %c0_i32_0 = arith.constant 0 : i32
    %c0_i32_1 = arith.constant 0 : i32
    return %c0_i32, %c0_i32_0 : i32, i32
  }
  func.func @transform_9(%arg0: i32) -> (i32, i32) {
    %c0_i32 = arith.constant 0 : i32
    %c0_i32_0 = arith.constant 0 : i32
    %c0_i32_1 = arith.constant 0 : i32
    return %c0_i32, %c0_i32_0 : i32, i32
  }
  func.func @transform_10(%arg0: i32) -> (i32, i32) {
    %c0_i32 = arith.constant 0 : i32
    %c0_i32_0 = arith.constant 0 : i32
    return %arg0, %c0_i32 : i32, i32
  }
}

</mosaic_0001>

<llo_original>
// kernel: tpu_custom_call.1
$region0: #{tpu_custom_call.1}
  #allocation0 [shape = 'u32[]', space=smem, size = 0x4, offset = 0x4, fixed_abs, tag = 'smem constant byte address 0x4 - core index']
  #allocation1 [shape = 'u32[72,128]{1,0:T(1,128)}', space=vmem, size = 0x9000, scoped, tag = 'internal scratch']
  %s0 = inlined_call_operand.hbm [shape: bf16[20,128], index: 0, kind: input, shape index: {}]
  %s1 = inlined_call_operand.hbm [shape: bf16[128,128], index: 1, kind: input, shape index: {}]
  %s2 = inlined_call_operand.vmem [shape: f32[1,128], index: 2, kind: input, shape index: {}]
  %s3 = inlined_call_operand.hbm [shape: bf16[128,128], index: 3, kind: input, shape index: {}]
  %s4 = inlined_call_operand.hbm [shape: f32[1,128], index: 4, kind: input, shape index: {}]
  %s5 = inlined_call_operand.hbm [shape: bf16[128,256], index: 5, kind: input, shape index: {}]
  %s6 = inlined_call_operand.vmem [shape: f32[1,256], index: 6, kind: input, shape index: {}]
  %s7 = inlined_call_operand.hbm [shape: bf16[128,128], index: 7, kind: input, shape index: {}]
  %s8 = inlined_call_operand.vmem [shape: f32[1,128], index: 8, kind: input, shape index: {}]
  %s9 = inlined_call_operand.hbm [shape: bf16[128,128], index: 9, kind: input, shape index: {}]
  %s10 = inlined_call_operand.hbm [shape: f32[20,128], index: 10, kind: output, shape index: {}]
  %s11 = sld [smem:[#allocation0]]
  $region101: #{tpu_custom_call.1} parent=0
    _
  %s13 = ssub.s32 1, %s11
  %s14 = scalar_select 0, %s13, %s11
  $region1: #{tpu_custom_call.1} parent=0
    #allocation2 [shape = 'u8[8192]{0}', space=vmem, size = 0x2000, scoped, tag = 'input window, operand 0']
    #allocation3 [shape = 's32[2]{0}', space=sflag, size = 0x8, scoped, tag = 'scoped memory for tpu_custom_call.1']
    #allocation4 [shape = 's32[2]{0}', space=sflag, size = 0x8, scoped, tag = 'scoped memory for tpu_custom_call.1']
    #allocation5 [shape = 'u8[32768]{0}', space=vmem, size = 0x8000, scoped, tag = 'input window, operand 1, single buffered']
    #allocation6 [shape = 's32[1]{0}', space=sflag, size = 0x4, scoped, tag = 'scoped memory for tpu_custom_call.1']
    #allocation7 [shape = 'u8[32768]{0}', space=vmem, size = 0x8000, scoped, tag = 'input window, operand 3, single buffered']
    #allocation8 [shape = 'u8[512]{0}', space=vmem, size = 0x400, scoped, tag = 'input window, operand 4, single buffered']
    #allocation9 [shape = 's32[1]{0}', space=sflag, size = 0x4, scoped, tag = 'scoped memory for tpu_custom_call.1']
    #allocation10 [shape = 'u8[65536]{0}', space=vmem, size = 0x10000, scoped, tag = 'input window, operand 5, single buffered']
    #allocation11 [shape = 'u8[32768]{0}', space=vmem, size = 0x8000, scoped, tag = 'input window, operand 7, single buffered']
    #allocation12 [shape = 's32[1]{0}', space=sflag, size = 0x4, scoped, tag = 'scoped memory for tpu_custom_call.1']
    #allocation13 [shape = 'u8[32768]{0}', space=vmem, size = 0x8000, scoped, tag = 'input window, operand 9, single buffered']
    #allocation14 [shape = 'u8[16384]{0}', space=vmem, size = 0x4000, scoped, tag = 'output window, operand 0']
    %15 = vsyncpa [#allocation3], 0
    %s16 = scalar_lea.sflag [#allocation3], 1
    %17 = vsyncpa %s16, 0
    %18 = vsyncpa [#allocation6], 0
    %19 = vsyncpa [#allocation9], 0
    %20 = vsyncpa [#allocation12], 0
    %21 = vsyncpa [#allocation4], 0
    %s22 = scalar_lea.sflag [#allocation4], 1
    %23 = vsyncpa %s22, 0
    loop: start=0, step=1, limit=4
    $region2: #{tpu_custom_call.1} parent=1 // loop_pre_header
      _
    $region3: #{tpu_custom_call.1} parent=1 // loop_header
      %s25 = sphi 0, %s29
      %p26 = scmp.ge.s32.totalorder %s25, 4
      %s35 = sphi 0, %s37
      %s38 = sphi 0, %s35
      %s39 = sphi 0, %s38
      %s55 = sphi 0, %s39
      %s59 = sphi 0, %s59
      %s61 = sphi 0, %s59
      %s62 = sphi 0, %s61
      %s76 = sphi 0, %s62
      %s80 = sphi 0, %s80
      %s82 = sphi 0, %s80
      %s83 = sphi 0, %s82
      %s97 = sphi 0, %s83
      %s101 = sphi 0, %s101
      %s103 = sphi 0, %s101
      %s104 = sphi 0, %s103
      %s118 = sphi 0, %s104
      %s122 = sphi 0, %s122
      %s124 = sphi 0, %s122
      %s125 = sphi 0, %s124
      %s139 = sphi 0, %s125
      %s143 = sphi 0, %s143
      %s145 = sphi 0, %s143
      %s146 = sphi 0, %s145
      %s160 = sphi 0, %s146
      %s164 = sphi 0, %s164
      %s166 = sphi 0, %s164
      %s167 = sphi 0, %s166
      %s181 = sphi 0, %s167
      %s185 = sphi 0, %s185
      %s187 = sphi 0, %s185
      %s188 = sphi 0, %s187
      %s202 = sphi 0, %s188
      %s206 = sphi 0, %s206
      %s208 = sphi 0, %s206
      %s209 = sphi 0, %s208
      %s223 = sphi 0, %s209
      %s227 = sphi 0, %s227
      %s229 = sphi 0, %s227
      %s230 = sphi 0, %s229
      %s244 = sphi 0, %s230
      %s250 = sphi 0, %s252
      %s253 = sphi 0, %s250
      %s254 = sphi 0, %s253
      %s270 = sphi 0, %s254
    $region4: #{tpu_custom_call.1} parent=1 // loop_header_branch
      %28 = sbr.rel (%p26) target = $region8
    $region5: #{tpu_custom_call.1} parent=1 // loop_body
      %s30 = ssub.s32 %s25, 1
      %s31 = ssub.s32 %s25, 2
      %s32 = sadd.s32 %s25, 1
      %s33 = ssub.s32 %s25, %s32
      %p34 = scmp.eq.s32.totalorder %s33, 0
      %s36 = sadd.s32 %s35, 1
      %s37 = scalar_select %p34, %s35, %s36
      %p40 = pneg %p34
      %p41 = scmp.eq.s32.totalorder %s25, 1
      %p42 = por %p40, %p41
      %p43 = scmp.ne.s32.totalorder %s35, %s38
      %p44 = scmp.eq.s32.totalorder %s25, 0
      %p45 = por %p43, %p44
      %p46 = scmp.ne.s32.totalorder %s35, %s38
      %p47 = scmp.eq.s32.totalorder %s30, 1
      %p48 = por %p46, %p47
      %p49 = scmp.ne.s32.totalorder %s38, %s39
      %p50 = scmp.eq.s32.totalorder %s30, 0
      %p51 = por %p49, %p50
      %p52 = scmp.ne.s32.totalorder %s38, %s39
      %p53 = scmp.eq.s32.totalorder %s31, 1
      %p54 = por %p52, %p53
      %p56 = scmp.ne.s32.totalorder %s39, %s55
      %p57 = scmp.eq.s32.totalorder %s31, 0
      %p58 = por %p56, %p57
      %s60 = sadd.s32 %s59, 1
      %p63 = scmp.eq.s32.totalorder %s25, 1
      %p64 = scmp.ne.s32.totalorder %s59, %s61
      %p65 = scmp.eq.s32.totalorder %s25, 0
      %p66 = por %p64, %p65
      %p67 = scmp.ne.s32.totalorder %s59, %s61
      %p68 = scmp.eq.s32.totalorder %s30, 1
      %p69 = por %p67, %p68
      %p70 = scmp.ne.s32.totalorder %s61, %s62
      %p71 = scmp.eq.s32.totalorder %s30, 0
      %p72 = por %p70, %p71
      %p73 = scmp.ne.s32.totalorder %s61, %s62
      %p74 = scmp.eq.s32.totalorder %s31, 1
      %p75 = por %p73, %p74
      %p77 = scmp.ne.s32.totalorder %s62, %s76
      %p78 = scmp.eq.s32.totalorder %s31, 0
      %p79 = por %p77, %p78
      %s81 = sadd.s32 %s80, 1
      %p84 = scmp.eq.s32.totalorder %s25, 1
      %p85 = scmp.ne.s32.totalorder %s80, %s82
      %p86 = scmp.eq.s32.totalorder %s25, 0
      %p87 = por %p85, %p86
      %p88 = scmp.ne.s32.totalorder %s80, %s82
      %p89 = scmp.eq.s32.totalorder %s30, 1
      %p90 = por %p88, %p89
      %p91 = scmp.ne.s32.totalorder %s82, %s83
      %p92 = scmp.eq.s32.totalorder %s30, 0
      %p93 = por %p91, %p92
      %p94 = scmp.ne.s32.totalorder %s82, %s83
      %p95 = scmp.eq.s32.totalorder %s31, 1
      %p96 = por %p94, %p95
      %p98 = scmp.ne.s32.totalorder %s83, %s97
      %p99 = scmp.eq.s32.totalorder %s31, 0
      %p100 = por %p98, %p99
      %s102 = sadd.s32 %s101, 1
      %p105 = scmp.eq.s32.totalorder %s25, 1
      %p106 = scmp.ne.s32.totalorder %s101, %s103
      %p107 = scmp.eq.s32.totalorder %s25, 0
      %p108 = por %p106, %p107
      %p109 = scmp.ne.s32.totalorder %s101, %s103
      %p110 = scmp.eq.s32.totalorder %s30, 1
      %p111 = por %p109, %p110
      %p112 = scmp.ne.s32.totalorder %s103, %s104
      %p113 = scmp.eq.s32.totalorder %s30, 0
      %p114 = por %p112, %p113
      %p115 = scmp.ne.s32.totalorder %s103, %s104
      %p116 = scmp.eq.s32.totalorder %s31, 1
      %p117 = por %p115, %p116
      %p119 = scmp.ne.s32.totalorder %s104, %s118
      %p120 = scmp.eq.s32.totalorder %s31, 0
      %p121 = por %p119, %p120
      %s123 = sadd.s32 %s122, 1
      %p126 = scmp.eq.s32.totalorder %s25, 1
      %p127 = scmp.ne.s32.totalorder %s122, %s124
      %p128 = scmp.eq.s32.totalorder %s25, 0
      %p129 = por %p127, %p128
      %p130 = scmp.ne.s32.totalorder %s122, %s124
      %p131 = scmp.eq.s32.totalorder %s30, 1
      %p132 = por %p130, %p131
      %p133 = scmp.ne.s32.totalorder %s124, %s125
      %p134 = scmp.eq.s32.totalorder %s30, 0
      %p135 = por %p133, %p134
      %p136 = scmp.ne.s32.totalorder %s124, %s125
      %p137 = scmp.eq.s32.totalorder %s31, 1
      %p138 = por %p136, %p137
      %p140 = scmp.ne.s32.totalorder %s125, %s139
      %p141 = scmp.eq.s32.totalorder %s31, 0
      %p142 = por %p140, %p141
      %s144 = sadd.s32 %s143, 1
      %p147 = scmp.eq.s32.totalorder %s25, 1
      %p148 = scmp.ne.s32.totalorder %s143, %s145
      %p149 = scmp.eq.s32.totalorder %s25, 0
      %p150 = por %p148, %p149
      %p151 = scmp.ne.s32.totalorder %s143, %s145
      %p152 = scmp.eq.s32.totalorder %s30, 1
      %p153 = por %p151, %p152
      %p154 = scmp.ne.s32.totalorder %s145, %s146
      %p155 = scmp.eq.s32.totalorder %s30, 0
      %p156 = por %p154, %p155
      %p157 = scmp.ne.s32.totalorder %s145, %s146
      %p158 = scmp.eq.s32.totalorder %s31, 1
      %p159 = por %p157, %p158
      %p161 = scmp.ne.s32.totalorder %s146, %s160
      %p162 = scmp.eq.s32.totalorder %s31, 0
      %p163 = por %p161, %p162
      %s165 = sadd.s32 %s164, 1
      %p168 = scmp.eq.s32.totalorder %s25, 1
      %p169 = scmp.ne.s32.totalorder %s164, %s166
      %p170 = scmp.eq.s32.totalorder %s25, 0
      %p171 = por %p169, %p170
      %p172 = scmp.ne.s32.totalorder %s164, %s166
      %p173 = scmp.eq.s32.totalorder %s30, 1
      %p174 = por %p172, %p173
      %p175 = scmp.ne.s32.totalorder %s166, %s167
      %p176 = scmp.eq.s32.totalorder %s30, 0
      %p177 = por %p175, %p176
      %p178 = scmp.ne.s32.totalorder %s166, %s167
      %p179 = scmp.eq.s32.totalorder %s31, 1
      %p180 = por %p178, %p179
      %p182 = scmp.ne.s32.totalorder %s167, %s181
      %p183 = scmp.eq.s32.totalorder %s31, 0
      %p184 = por %p182, %p183
      %s186 = sadd.s32 %s185, 1
      %p189 = scmp.eq.s32.totalorder %s25, 1
      %p190 = scmp.ne.s32.totalorder %s185, %s187
      %p191 = scmp.eq.s32.totalorder %s25, 0
      %p192 = por %p190, %p191
      %p193 = scmp.ne.s32.totalorder %s185, %s187
      %p194 = scmp.eq.s32.totalorder %s30, 1
      %p195 = por %p193, %p194
      %p196 = scmp.ne.s32.totalorder %s187, %s188
      %p197 = scmp.eq.s32.totalorder %s30, 0
      %p198 = por %p196, %p197
      %p199 = scmp.ne.s32.totalorder %s187, %s188
      %p200 = scmp.eq.s32.totalorder %s31, 1
      %p201 = por %p199, %p200
      %p203 = scmp.ne.s32.totalorder %s188, %s202
      %p204 = scmp.eq.s32.totalorder %s31, 0
      %p205 = por %p203, %p204
      %s207 = sadd.s32 %s206, 1
      %p210 = scmp.eq.s32.totalorder %s25, 1
      %p211 = scmp.ne.s32.totalorder %s206, %s208
      %p212 = scmp.eq.s32.totalorder %s25, 0
      %p213 = por %p211, %p212
      %p214 = scmp.ne.s32.totalorder %s206, %s208
      %p215 = scmp.eq.s32.totalorder %s30, 1
      %p216 = por %p214, %p215
      %p217 = scmp.ne.s32.totalorder %s208, %s209
      %p218 = scmp.eq.s32.totalorder %s30, 0
      %p219 = por %p217, %p218
      %p220 = scmp.ne.s32.totalorder %s208, %s209
      %p221 = scmp.eq.s32.totalorder %s31, 1
      %p222 = por %p220, %p221
      %p224 = scmp.ne.s32.totalorder %s209, %s223
      %p225 = scmp.eq.s32.totalorder %s31, 0
      %p226 = por %p224, %p225
      %s228 = sadd.s32 %s227, 1
      %p231 = scmp.eq.s32.totalorder %s25, 1
      %p232 = scmp.ne.s32.totalorder %s227, %s229
      %p233 = scmp.eq.s32.totalorder %s25, 0
      %p234 = por %p232, %p233
      %p235 = scmp.ne.s32.totalorder %s227, %s229
      %p236 = scmp.eq.s32.totalorder %s30, 1
      %p237 = por %p235, %p236
      %p238 = scmp.ne.s32.totalorder %s229, %s230
      %p239 = scmp.eq.s32.totalorder %s30, 0
      %p240 = por %p238, %p239
      %p241 = scmp.ne.s32.totalorder %s229, %s230
      %p242 = scmp.eq.s32.totalorder %s31, 1
      %p243 = por %p241, %p242
      %p245 = scmp.ne.s32.totalorder %s230, %s244
      %p246 = scmp.eq.s32.totalorder %s31, 0
      %p247 = por %p245, %p246
      %s248 = ssub.s32 %s25, %s32
      %p249 = scmp.eq.s32.totalorder %s248, 0
      %s251 = sadd.s32 %s250, 1
      %s252 = scalar_select %p249, %s250, %s251
      %p255 = pneg %p249
      %p256 = scmp.eq.s32.totalorder %s25, 1
      %p257 = por %p255, %p256
      %p258 = scmp.ne.s32.totalorder %s250, %s253
      %p259 = scmp.eq.s32.totalorder %s25, 0
      %p260 = por %p258, %p259
      %p261 = scmp.ne.s32.totalorder %s250, %s253
      %p262 = scmp.eq.s32.totalorder %s30, 1
      %p263 = por %p261, %p262
      %p264 = scmp.ne.s32.totalorder %s253, %s254
      %p265 = scmp.eq.s32.totalorder %s30, 0
      %p266 = por %p264, %p265
      %p267 = scmp.ne.s32.totalorder %s253, %s254
      %p268 = scmp.eq.s32.totalorder %s31, 1
      %p269 = por %p267, %p268
      %p271 = scmp.ne.s32.totalorder %s254, %s270
      %p272 = scmp.eq.s32.totalorder %s31, 0
      %p273 = por %p271, %p272
      %p274 = scmp.le.s32.totalorder 1, %s25
      %p275 = scmp.lt.s32.totalorder %s25, 3
      %p276 = pnand %p274, %p275
      %p277 = pneg %p276
      // Predicated region
      $region9: #{tpu_custom_call.1} parent=5 // pred_check
        _
      $region10: #{tpu_custom_call.1} parent=5 // pred_check_branch
        %279 = sbr.rel (%p276) target = $region12
      $region11: #{tpu_custom_call.1} parent=5 // pred_region
        %s280 = ssub.s32 %s25, 1
        // Predicated region
        $region13: #{tpu_custom_call.1} parent=11 // pred_check
          %p281 = pneg %p72
        $region14: #{tpu_custom_call.1} parent=11 // pred_check_branch
          %283 = sbr.rel (%p281) target = $region16
        $region15: #{tpu_custom_call.1} parent=11 // pred_region
          %285 = vsyncadd [#allocation6], 0
          %s286 = sshll.u32 %s1, 4
          %s287 = int_to_ptr.hbm [resolvable:$true] %s286
          %s288 = sshll.u32 [#allocation5], 4
          %s289 = int_to_ptr.vmem [resolvable:$true] %s288
          %294 = dma.hbm_to_vmem [thread:$0]  %s287, 1024, %s289, [#allocation6], 64, 64, 4
        $region16: #{tpu_custom_call.1} parent=11 // pred_fallthru
          _
        // Predicated region
        $region17: #{tpu_custom_call.1} parent=11 // pred_check
          %p295 = pneg %p93
        $region18: #{tpu_custom_call.1} parent=11 // pred_check_branch
          %297 = sbr.rel (%p295) target = $region20
        $region19: #{tpu_custom_call.1} parent=11 // pred_region
          _
        $region20: #{tpu_custom_call.1} parent=11 // pred_fallthru
          _
        // Predicated region
        $region21: #{tpu_custom_call.1} parent=11 // pred_check
          %p298 = pneg %p114
        $region22: #{tpu_custom_call.1} parent=11 // pred_check_branch
          %300 = sbr.rel (%p298) target = $region24
        $region23: #{tpu_custom_call.1} parent=11 // pred_region
          %302 = vsyncadd [#allocation6], 0
          %s303 = sshll.u32 %s3, 4
          %s304 = int_to_ptr.hbm [resolvable:$true] %s303
          %s305 = sshll.u32 [#allocation7], 4
          %s306 = int_to_ptr.vmem [resolvable:$true] %s305
          %311 = dma.hbm_to_vmem [thread:$0]  %s304, 1024, %s306, [#allocation6], 64, 64, 4
        $region24: #{tpu_custom_call.1} parent=11 // pred_fallthru
          _
        // Predicated region
        $region25: #{tpu_custom_call.1} parent=11 // pred_check
          %p312 = pneg %p135
        $region26: #{tpu_custom_call.1} parent=11 // pred_check_branch
          %314 = sbr.rel (%p312) target = $region28
        $region27: #{tpu_custom_call.1} parent=11 // pred_region
          %316 = vsyncadd [#allocation9], 0
          %s318 = sshll.u32 %s4, 4
          %s319 = int_to_ptr.hbm [resolvable:$true] %s318
          %s320 = sshll.u32 [#allocation8], 4
          %s321 = int_to_ptr.vmem [resolvable:$true] %s320
          %323 = dma.hbm_to_vmem [thread:$0]  %s319, 16, %s321, [#allocation9]
        $region28: #{tpu_custom_call.1} parent=11 // pred_fallthru
          _
        // Predicated region
        $region29: #{tpu_custom_call.1} parent=11 // pred_check
          %p324 = pneg %p156
        $region30: #{tpu_custom_call.1} parent=11 // pred_check_branch
          %326 = sbr.rel (%p324) target = $region32
        $region31: #{tpu_custom_call.1} parent=11 // pred_region
          %328 = vsyncadd [#allocation9], 0
          %s329 = sshll.u32 %s5, 4
          %s330 = int_to_ptr.hbm [resolvable:$true] %s329
          %s331 = sshll.u32 [#allocation10], 4
          %s332 = int_to_ptr.vmem [resolvable:$true] %s331
          %337 = dma.hbm_to_vmem [thread:$0]  %s330, 2048, %s332, [#allocation9], 128, 128, 8
        $region32: #{tpu_custom_call.1} parent=11 // pred_fallthru
          _
        // Predicated region
        $region33: #{tpu_custom_call.1} parent=11 // pred_check
          %p338 = pneg %p177
        $region34: #{tpu_custom_call.1} parent=11 // pred_check_branch
          %340 = sbr.rel (%p338) target = $region36
        $region35: #{tpu_custom_call.1} parent=11 // pred_region
          _
        $region36: #{tpu_custom_call.1} parent=11 // pred_fallthru
          _
        // Predicated region
        $region37: #{tpu_custom_call.1} parent=11 // pred_check
          %p341 = pneg %p198
        $region38: #{tpu_custom_call.1} parent=11 // pred_check_branch
          %343 = sbr.rel (%p341) target = $region40
        $region39: #{tpu_custom_call.1} parent=11 // pred_region
          %345 = vsyncadd [#allocation12], 0
          %s346 = sshll.u32 %s7, 4
          %s347 = int_to_ptr.hbm [resolvable:$true] %s346
          %s348 = sshll.u32 [#allocation11], 4
          %s349 = int_to_ptr.vmem [resolvable:$true] %s348
          %354 = dma.hbm_to_vmem [thread:$0]  %s347, 1024, %s349, [#allocation12], 64, 64, 4
        $region40: #{tpu_custom_call.1} parent=11 // pred_fallthru
          _
        // Predicated region
        $region41: #{tpu_custom_call.1} parent=11 // pred_check
          %p355 = pneg %p219
        $region42: #{tpu_custom_call.1} parent=11 // pred_check_branch
          %357 = sbr.rel (%p355) target = $region44
        $region43: #{tpu_custom_call.1} parent=11 // pred_region
          _
        $region44: #{tpu_custom_call.1} parent=11 // pred_fallthru
          _
        // Predicated region
        $region45: #{tpu_custom_call.1} parent=11 // pred_check
          %p358 = pneg %p240
        $region46: #{tpu_custom_call.1} parent=11 // pred_check_branch
          %360 = sbr.rel (%p358) target = $region48
        $region47: #{tpu_custom_call.1} parent=11 // pred_region
          %362 = vsyncadd [#allocation12], 0
          %s363 = sshll.u32 %s9, 4
          %s364 = int_to_ptr.hbm [resolvable:$true] %s363
          %s365 = sshll.u32 [#allocation13], 4
          %s366 = int_to_ptr.vmem [resolvable:$true] %s365
          %371 = dma.hbm_to_vmem [thread:$0]  %s364, 1024, %s366, [#allocation12], 64, 64, 4
        $region48: #{tpu_custom_call.1} parent=11 // pred_fallthru
          _
      $region12: #{tpu_custom_call.1} parent=5 // pred_fallthru
        _
      %p372 = scmp.lt.s32.totalorder %s25, 2
      // Predicated region
      $region49: #{tpu_custom_call.1} parent=5 // pred_check
        %p373 = pneg %p372
      $region50: #{tpu_custom_call.1} parent=5 // pred_check_branch
        %375 = sbr.rel (%p373) target = $region52
      $region51: #{tpu_custom_call.1} parent=5 // pred_region
        // Predicated region
        $region53: #{tpu_custom_call.1} parent=51 // pred_check
          %p376 = pneg %p45
        $region54: #{tpu_custom_call.1} parent=51 // pred_check_branch
          %378 = sbr.rel (%p376) target = $region56
        $region55: #{tpu_custom_call.1} parent=51 // pred_region
          %s379 = sand.u32 %s35, 1
          %s380 = scalar_lea.sflag [#allocation3], %s379
          %s381 = sand.u32 %s35, 1
          %s382 = smul.addr %s381, 8
          %s383 = scalar_lea.vmem [#allocation2], %s382
          %s384 = smul.u32 2, %s25
          %s385 = ssub.s32 3, %s384
          %p386 = scmp.lt.s32.totalorder %s385, 2
          %s387 = scalar_select %p386, %s385, 2
          %s388 = smul.u32 4, %s387
          %s389 = ssub.s32 8, %s388
          %s390 = sshll.u32 %s389, 4
          %391 = vsyncadd %s380, %s390
          %p392 = scmp.ne.s32.totalorder 0, %s388
          %s393 = smul.addr %s384, 4
          %s394 = scalar_lea.hbm %s0, %s393
          %s395 = smul.u32 4, %s387
          %s396 = sshll.u32 %s394, 4
          %s397 = int_to_ptr.hbm [resolvable:$true] %s396
          %s398 = sshll.u32 %s383, 4
          %s399 = int_to_ptr.vmem [resolvable:$true] %s398
          %s400 = sshll.u32 %s395, 4
          %404 = dma.hbm_to_vmem [thread:$0]  (%p392), %s397, %s400, %s399, %s380, 64, 64, 4
        $region56: #{tpu_custom_call.1} parent=51 // pred_fallthru
          _
      $region52: #{tpu_custom_call.1} parent=5 // pred_fallthru
        _
      %p405 = scmp.le.s32.totalorder 1, %s25
      %p406 = scmp.lt.s32.totalorder %s25, 3
      %p407 = pnand %p405, %p406
      %p408 = pneg %p407
      // Predicated region
      $region57: #{tpu_custom_call.1} parent=5 // pred_check
        _
      $region58: #{tpu_custom_call.1} parent=5 // pred_check_branch
        %410 = sbr.rel (%p407) target = $region60
      $region59: #{tpu_custom_call.1} parent=5 // pred_region
        %s411 = ssub.s32 %s25, 1
        %s412 = sand.u32 %s38, 1
        %s413 = scalar_lea.sflag [#allocation3], %s412
        %s414 = sand.u32 %s38, 1
        %s415 = smul.addr %s414, 8
        %s416 = scalar_lea.vmem [#allocation2], %s415
        // Predicated region
        $region61: #{tpu_custom_call.1} parent=59 // pred_check
          %p417 = pneg %p51
        $region62: #{tpu_custom_call.1} parent=59 // pred_check_branch
          %419 = sbr.rel (%p417) target = $region64
        $region63: #{tpu_custom_call.1} parent=59 // pred_region
          %421 = dma.done %s413, 128
        $region64: #{tpu_custom_call.1} parent=59 // pred_fallthru
          _
        // Predicated region
        $region65: #{tpu_custom_call.1} parent=59 // pred_check
          %p422 = pneg %p72
        $region66: #{tpu_custom_call.1} parent=59 // pred_check_branch
          %424 = sbr.rel (%p422) target = $region68
        $region67: #{tpu_custom_call.1} parent=59 // pred_region
          %426 = dma.done [#allocation6], 1024
        $region68: #{tpu_custom_call.1} parent=59 // pred_fallthru
          _
        // Predicated region
        $region69: #{tpu_custom_call.1} parent=59 // pred_check
          %p427 = pneg %p114
        $region70: #{tpu_custom_call.1} parent=59 // pred_check_branch
          %429 = sbr.rel (%p427) target = $region72
        $region71: #{tpu_custom_call.1} parent=59 // pred_region
          %431 = dma.done [#allocation6], 1024
        $region72: #{tpu_custom_call.1} parent=59 // pred_fallthru
          _
        // Predicated region
        $region73: #{tpu_custom_call.1} parent=59 // pred_check
          %p432 = pneg %p135
        $region74: #{tpu_custom_call.1} parent=59 // pred_check_branch
          %434 = sbr.rel (%p432) target = $region76
        $region75: #{tpu_custom_call.1} parent=59 // pred_region
          %436 = dma.done [#allocation9], 16
        $region76: #{tpu_custom_call.1} parent=59 // pred_fallthru
          _
        // Predicated region
        $region77: #{tpu_custom_call.1} parent=59 // pred_check
          %p437 = pneg %p156
        $region78: #{tpu_custom_call.1} parent=59 // pred_check_branch
          %439 = sbr.rel (%p437) target = $region80
        $region79: #{tpu_custom_call.1} parent=59 // pred_region
          %441 = dma.done [#allocation9], 2048
        $region80: #{tpu_custom_call.1} parent=59 // pred_fallthru
          _
        // Predicated region
        $region81: #{tpu_custom_call.1} parent=59 // pred_check
          %p442 = pneg %p198
        $region82: #{tpu_custom_call.1} parent=59 // pred_check_branch
          %444 = sbr.rel (%p442) target = $region84
        $region83: #{tpu_custom_call.1} parent=59 // pred_region
          %446 = dma.done [#allocation12], 1024
        $region84: #{tpu_custom_call.1} parent=59 // pred_fallthru
          _
        // Predicated region
        $region85: #{tpu_custom_call.1} parent=59 // pred_check
          %p447 = pneg %p240
        $region86: #{tpu_custom_call.1} parent=59 // pred_check_branch
          %449 = sbr.rel (%p447) target = $region88
        $region87: #{tpu_custom_call.1} parent=59 // pred_region
          %451 = dma.done [#allocation12], 1024
        $region88: #{tpu_custom_call.1} parent=59 // pred_fallthru
          _
        %s452 = sand.u32 %s38, 1
        %s453 = scalar_lea.sflag [#allocation3], %s452
        %s454 = sand.u32 %s38, 1
        %s455 = smul.addr %s454, 8
        %s456 = scalar_lea.vmem [#allocation2], %s455
        %p457 = pneg %p51
        %p458 = pneg %p48
        %p459 = pneg %p72
        %p460 = pneg %p69
        %p461 = pneg %p93
        %p462 = pneg %p90
        %p463 = pneg %p114
        %p464 = pneg %p111
        %p465 = pneg %p135
        %p466 = pneg %p132
        %p467 = pneg %p156
        %p468 = pneg %p153
        %p469 = pneg %p177
        %p470 = pneg %p174
        %p471 = pneg %p198
        %p472 = pneg %p195
        %p473 = pneg %p219
        %p474 = pneg %p216
        %p475 = pneg %p240
        %p476 = pneg %p237
        %p477 = pneg %p266
        %p478 = pneg %p263
        %s479 = sand.u32 %s253, 1
        %s480 = scalar_lea.sflag [#allocation4], %s479
        %s481 = sand.u32 %s253, 1
        %s482 = smul.addr %s481, 16
        %s483 = scalar_lea.vmem [#allocation14], %s482
        %s484 = smul.u32 2, %s30
        %s485 = ssub.s32 3, %s484
        %p486 = scmp.lt.s32.totalorder %s485, 2
        %s487 = scalar_select %p486, %s485, 2
        %s488 = smul.u32 4, %s487
        %s489 = smul.u32 2, %s30
        %s490 = ssub.s32 3, %s489
        %p491 = scmp.lt.s32.totalorder %s490, 2
        %s492 = scalar_select %p491, %s490, 2
        %s493 = smul.u32 8, %s492
        %v494 = vld [vmem:[%s416] sm:$0xf]
        %v495 = vld [vmem:[%s416 + $0x4] sm:$0xf]
        %v496 = vunpack.c.l.bf16 %v494
        %v497 = vunpack.c.l.bf16 %v495
        %v498 = vld [vmem:[#allocation5] sm:$0xf]
        %v499 = vld [vmem:[#allocation5 + $0x4] sm:$0xf]
        %v500 = vld [vmem:[#allocation5 + $0x8] sm:$0xf]
        %v501 = vld [vmem:[#allocation5 + $0xc] sm:$0xf]
        %v502 = vld [vmem:[#allocation5 + $0x10] sm:$0xf]
        %v503 = vld [vmem:[#allocation5 + $0x14] sm:$0xf]
        %v504 = vld [vmem:[#allocation5 + $0x18] sm:$0xf]
        %v505 = vld [vmem:[#allocation5 + $0x1c] sm:$0xf]
        %v506 = vld [vmem:[#allocation5 + $0x20] sm:$0xf]
        %v507 = vld [vmem:[#allocation5 + $0x24] sm:$0xf]
        %v508 = vld [vmem:[#allocation5 + $0x28] sm:$0xf]
        %v509 = vld [vmem:[#allocation5 + $0x2c] sm:$0xf]
        %v510 = vld [vmem:[#allocation5 + $0x30] sm:$0xf]
        %v511 = vld [vmem:[#allocation5 + $0x34] sm:$0xf]
        %v512 = vld [vmem:[#allocation5 + $0x38] sm:$0xf]
        %v513 = vld [vmem:[#allocation5 + $0x3c] sm:$0xf]
        %v514 = vld [vmem:[%s2] sm:$0x1]
        %v516 = vperm.slane %v514, 0
        %v520 = vunpack.c.l.b16 %v494
        %v521 = vunpack.c.l.b16 %v495
        %v522 = vpack.c.b16 %v521, %v520
        %v540 = vunpack.c.l.b16 %v498
        %v541 = vunpack.c.l.b16 %v499
        %v542 = vunpack.c.l.b16 %v500
        %v543 = vunpack.c.l.b16 %v501
        %v544 = vunpack.c.l.b16 %v502
        %v545 = vunpack.c.l.b16 %v503
        %v546 = vunpack.c.l.b16 %v504
        %v547 = vunpack.c.l.b16 %v505
        %v548 = vunpack.c.l.b16 %v506
        %v549 = vunpack.c.l.b16 %v507
        %v550 = vunpack.c.l.b16 %v508
        %v551 = vunpack.c.l.b16 %v509
        %v552 = vunpack.c.l.b16 %v510
        %v553 = vunpack.c.l.b16 %v511
        %v554 = vunpack.c.l.b16 %v512
        %v555 = vunpack.c.l.b16 %v513
        %v556 = vpack.c.b16 %v541, %v540
        %v557 = vpack.c.b16 %v543, %v542
        %v558 = vpack.c.b16 %v545, %v544
        %v559 = vpack.c.b16 %v547, %v546
        %v560 = vpack.c.b16 %v549, %v548
        %v561 = vpack.c.b16 %v551, %v550
        %v562 = vpack.c.b16 %v553, %v552
        %v563 = vpack.c.b16 %v555, %v554
        %572 = vmatpush.bf16.msra.mxu0 %v563
        %573 = vmatpush.bf16.msra.mxu0 %v562
        %574 = vmatpush.bf16.msra.mxu0 %v561
        %575 = vmatpush.bf16.msra.mxu0 %v560
        %576 = vmatpush.bf16.msra.mxu0 %v559
        %577 = vmatpush.bf16.msra.mxu0 %v558
        %578 = vmatpush.bf16.msra.mxu0 %v557
        %579 = vmatpush.bf16.msra.mxu0 %v556
        %580 = vmatmul.bf16.gmra.mxu0 %v522
        %v581 = vpop.f32.mrf.mxu0
        %v582 = vadd.f32 %v516, %v581
        %v583 = vpop.f32.mrf.mxu0
        %v584 = vadd.f32 %v516, %v583
        %585 = vdwg.mxu0
        %vm586 = vcmp.gt.f32.partialorder %v582, 0.0
        %vm587 = vcmp.gt.f32.partialorder %v584, 0.0
        %v588 = vmul.f32 %v582, 0.01
        %v589 = vmul.f32 %v584, 0.01
        %v590 = vsel %vm586, %v582, %v588
        %v591 = vsel %vm587, %v584, %v589
        %v592 = vpack.c.bf16 %v591, %v590
        %v593 = vld [vmem:[#allocation7] sm:$0xf]
        %v594 = vld [vmem:[#allocation7 + $0x4] sm:$0xf]
        %v595 = vld [vmem:[#allocation7 + $0x8] sm:$0xf]
        %v596 = vld [vmem:[#allocation7 + $0xc] sm:$0xf]
        %v597 = vld [vmem:[#allocation7 + $0x10] sm:$0xf]
        %v598 = vld [vmem:[#allocation7 + $0x14] sm:$0xf]
        %v599 = vld [vmem:[#allocation7 + $0x18] sm:$0xf]
        %v600 = vld [vmem:[#allocation7 + $0x1c] sm:$0xf]
        %v601 = vld [vmem:[#allocation7 + $0x20] sm:$0xf]
        %v602 = vld [vmem:[#allocation7 + $0x24] sm:$0xf]
        %v603 = vld [vmem:[#allocation7 + $0x28] sm:$0xf]
        %v604 = vld [vmem:[#allocation7 + $0x2c] sm:$0xf]
        %v605 = vld [vmem:[#allocation7 + $0x30] sm:$0xf]
        %v606 = vld [vmem:[#allocation7 + $0x34] sm:$0xf]
        %v607 = vld [vmem:[#allocation7 + $0x38] sm:$0xf]
        %v608 = vld [vmem:[#allocation7 + $0x3c] sm:$0xf]
        %v609 = vld [vmem:[#allocation8] sm:$0x1]
        %v611 = vperm.slane %v609, 0
        %v629 = vunpack.c.l.b16 %v593
        %v630 = vunpack.c.l.b16 %v594
        %v631 = vunpack.c.l.b16 %v595
        %v632 = vunpack.c.l.b16 %v596
        %v633 = vunpack.c.l.b16 %v597
        %v634 = vunpack.c.l.b16 %v598
        %v635 = vunpack.c.l.b16 %v599
        %v636 = vunpack.c.l.b16 %v600
        %v637 = vunpack.c.l.b16 %v601
        %v638 = vunpack.c.l.b16 %v602
        %v639 = vunpack.c.l.b16 %v603
        %v640 = vunpack.c.l.b16 %v604
        %v641 = vunpack.c.l.b16 %v605
        %v642 = vunpack.c.l.b16 %v606
        %v643 = vunpack.c.l.b16 %v607
        %v644 = vunpack.c.l.b16 %v608
        %v645 = vpack.c.b16 %v630, %v629
        %v646 = vpack.c.b16 %v632, %v631
        %v647 = vpack.c.b16 %v634, %v633
        %v648 = vpack.c.b16 %v636, %v635
        %v649 = vpack.c.b16 %v638, %v637
        %v650 = vpack.c.b16 %v640, %v639
        %v651 = vpack.c.b16 %v642, %v641
        %v652 = vpack.c.b16 %v644, %v643
        %661 = vmatpush.bf16.msra.mxu0 %v652
        %662 = vmatpush.bf16.msra.mxu0 %v651
        %663 = vmatpush.bf16.msra.mxu0 %v650
        %664 = vmatpush.bf16.msra.mxu0 %v649
        %665 = vmatpush.bf16.msra.mxu0 %v648
        %666 = vmatpush.bf16.msra.mxu0 %v647
        %667 = vmatpush.bf16.msra.mxu0 %v646
        %668 = vmatpush.bf16.msra.mxu0 %v645
        %669 = vmatmul.bf16.gmra.mxu0 %v592
        %v670 = vpop.f32.mrf.mxu0
        %v671 = vadd.f32 %v611, %v670
        %v672 = vpop.f32.mrf.mxu0
        %v673 = vadd.f32 %v611, %v672
        %674 = vdwg.mxu0
        %v675 = vadd.f32 %v671, %v496
        %v676 = vadd.f32 %v673, %v497
        %vm677 = vcmp.gt.f32.partialorder %v675, 0.0
        %vm678 = vcmp.gt.f32.partialorder %v676, 0.0
        %v679 = vmul.f32 %v675, 0.01
        %v680 = vmul.f32 %v676, 0.01
        %v681 = vsel %vm677, %v675, %v679
        %v682 = vsel %vm678, %v676, %v680
        %v683 = vpack.c.bf16 %v682, %v681
        %v684 = vld [vmem:[#allocation10] sm:$0xff]
        %v685 = vld [vmem:[#allocation10 + $0x8] sm:$0xff]
        %v686 = vld [vmem:[#allocation10 + $0x10] sm:$0xff]
        %v687 = vld [vmem:[#allocation10 + $0x18] sm:$0xff]
        %v688 = vld [vmem:[#allocation10 + $0x20] sm:$0xff]
        %v689 = vld [vmem:[#allocation10 + $0x28] sm:$0xff]
        %v690 = vld [vmem:[#allocation10 + $0x30] sm:$0xff]
        %v691 = vld [vmem:[#allocation10 + $0x38] sm:$0xff]
        %v692 = vld [vmem:[#allocation10 + $0x40] sm:$0xff]
        %v693 = vld [vmem:[#allocation10 + $0x48] sm:$0xff]
        %v694 = vld [vmem:[#allocation10 + $0x50] sm:$0xff]
        %v695 = vld [vmem:[#allocation10 + $0x58] sm:$0xff]
        %v696 = vld [vmem:[#allocation10 + $0x60] sm:$0xff]
        %v697 = vld [vmem:[#allocation10 + $0x68] sm:$0xff]
        %v698 = vld [vmem:[#allocation10 + $0x70] sm:$0xff]
        %v699 = vld [vmem:[#allocation10 + $0x78] sm:$0xff]
        %v700 = vld [vmem:[%s6] sm:$0x3]
        %v702 = vperm.slane %v700, 0
        %v703 = vperm.slane %v700, 1
        %v722 = vunpack.c.l.b16 %v684
        %v723 = vunpack.c.h.b16 %v684
        %v724 = vunpack.c.l.b16 %v685
        %v725 = vunpack.c.h.b16 %v685
        %v726 = vunpack.c.l.b16 %v686
        %v727 = vunpack.c.h.b16 %v686
        %v728 = vunpack.c.l.b16 %v687
        %v729 = vunpack.c.h.b16 %v687
        %v730 = vunpack.c.l.b16 %v688
        %v731 = vunpack.c.h.b16 %v688
        %v732 = vunpack.c.l.b16 %v689
        %v733 = vunpack.c.h.b16 %v689
        %v734 = vunpack.c.l.b16 %v690
        %v735 = vunpack.c.h.b16 %v690
        %v736 = vunpack.c.l.b16 %v691
        %v737 = vunpack.c.h.b16 %v691
        %v738 = vunpack.c.l.b16 %v692
        %v739 = vunpack.c.h.b16 %v692
        %v740 = vunpack.c.l.b16 %v693
        %v741 = vunpack.c.h.b16 %v693
        %v742 = vunpack.c.l.b16 %v694
        %v743 = vunpack.c.h.b16 %v694
        %v744 = vunpack.c.l.b16 %v695
        %v745 = vunpack.c.h.b16 %v695
        %v746 = vunpack.c.l.b16 %v696
        %v747 = vunpack.c.h.b16 %v696
        %v748 = vunpack.c.l.b16 %v697
        %v749 = vunpack.c.h.b16 %v697
        %v750 = vunpack.c.l.b16 %v698
        %v751 = vunpack.c.h.b16 %v698
        %v752 = vunpack.c.l.b16 %v699
        %v753 = vunpack.c.h.b16 %v699
        %v754 = vpack.c.b16 %v724, %v722
        %v755 = vpack.c.b16 %v725, %v723
        %v756 = vpack.c.b16 %v728, %v726
        %v757 = vpack.c.b16 %v729, %v727
        %v758 = vpack.c.b16 %v732, %v730
        %v759 = vpack.c.b16 %v733, %v731
        %v760 = vpack.c.b16 %v736, %v734
        %v761 = vpack.c.b16 %v737, %v735
        %v762 = vpack.c.b16 %v740, %v738
        %v763 = vpack.c.b16 %v741, %v739
        %v764 = vpack.c.b16 %v744, %v742
        %v765 = vpack.c.b16 %v745, %v743
        %v766 = vpack.c.b16 %v748, %v746
        %v767 = vpack.c.b16 %v749, %v747
        %v768 = vpack.c.b16 %v752, %v750
        %v769 = vpack.c.b16 %v753, %v751
        %786 = vmatpush.bf16.msra.mxu0 %v768
        %787 = vmatpush.bf16.msra.mxu0 %v766
        %788 = vmatpush.bf16.msra.mxu0 %v764
        %789 = vmatpush.bf16.msra.mxu0 %v762
        %790 = vmatpush.bf16.msra.mxu0 %v760
        %791 = vmatpush.bf16.msra.mxu0 %v758
        %792 = vmatpush.bf16.msra.mxu0 %v756
        %793 = vmatpush.bf16.msra.mxu0 %v754
        %794 = vmatmul.bf16.gmra.mxu0 %v683
        %v795 = vpop.f32.mrf.mxu0
        %v796 = vadd.f32 %v702, %v795
        %v797 = vpop.f32.mrf.mxu0
        %v798 = vadd.f32 %v702, %v797
        %799 = vdwg.mxu0
        %800 = vmatpush.bf16.msra.mxu0 %v769
        %801 = vmatpush.bf16.msra.mxu0 %v767
        %802 = vmatpush.bf16.msra.mxu0 %v765
        %803 = vmatpush.bf16.msra.mxu0 %v763
        %804 = vmatpush.bf16.msra.mxu0 %v761
        %805 = vmatpush.bf16.msra.mxu0 %v759
        %806 = vmatpush.bf16.msra.mxu0 %v757
        %807 = vmatpush.bf16.msra.mxu0 %v755
        %808 = vmatmul.bf16.gmra.mxu0 %v683
        %v809 = vpop.f32.mrf.mxu0
        %v810 = vadd.f32 %v703, %v809
        %v811 = vpop.f32.mrf.mxu0
        %v812 = vadd.f32 %v703, %v811
        %813 = vdwg.mxu0
        %vm814 = vcmp.gt.f32.partialorder %v796, 0.0
        %vm815 = vcmp.gt.f32.partialorder %v798, 0.0
        %v816 = vmul.f32 %v796, 0.01
        %v817 = vmul.f32 %v798, 0.01
        %v818 = vsel %vm814, %v796, %v816
        %v819 = vsel %vm815, %v798, %v817
        %v820 = vpack.c.bf16 %v819, %v818
        %v821 = vld [vmem:[#allocation11] sm:$0xf]
        %v822 = vld [vmem:[#allocation11 + $0x4] sm:$0xf]
        %v823 = vld [vmem:[#allocation11 + $0x8] sm:$0xf]
        %v824 = vld [vmem:[#allocation11 + $0xc] sm:$0xf]
        %v825 = vld [vmem:[#allocation11 + $0x10] sm:$0xf]
        %v826 = vld [vmem:[#allocation11 + $0x14] sm:$0xf]
        %v827 = vld [vmem:[#allocation11 + $0x18] sm:$0xf]
        %v828 = vld [vmem:[#allocation11 + $0x1c] sm:$0xf]
        %v829 = vld [vmem:[#allocation11 + $0x20] sm:$0xf]
        %v830 = vld [vmem:[#allocation11 + $0x24] sm:$0xf]
        %v831 = vld [vmem:[#allocation11 + $0x28] sm:$0xf]
        %v832 = vld [vmem:[#allocation11 + $0x2c] sm:$0xf]
        %v833 = vld [vmem:[#allocation11 + $0x30] sm:$0xf]
        %v834 = vld [vmem:[#allocation11 + $0x34] sm:$0xf]
        %v835 = vld [vmem:[#allocation11 + $0x38] sm:$0xf]
        %v836 = vld [vmem:[#allocation11 + $0x3c] sm:$0xf]
        %v837 = vld [vmem:[%s8] sm:$0x1]
        %v839 = vperm.slane %v837, 0
        %v857 = vunpack.c.l.b16 %v821
        %v858 = vunpack.c.l.b16 %v822
        %v859 = vunpack.c.l.b16 %v823
        %v860 = vunpack.c.l.b16 %v824
        %v861 = vunpack.c.l.b16 %v825
        %v862 = vunpack.c.l.b16 %v826
        %v863 = vunpack.c.l.b16 %v827
        %v864 = vunpack.c.l.b16 %v828
        %v865 = vunpack.c.l.b16 %v829
        %v866 = vunpack.c.l.b16 %v830
        %v867 = vunpack.c.l.b16 %v831
        %v868 = vunpack.c.l.b16 %v832
        %v869 = vunpack.c.l.b16 %v833
        %v870 = vunpack.c.l.b16 %v834
        %v871 = vunpack.c.l.b16 %v835
        %v872 = vunpack.c.l.b16 %v836
        %v873 = vpack.c.b16 %v858, %v857
        %v874 = vpack.c.b16 %v860, %v859
        %v875 = vpack.c.b16 %v862, %v861
        %v876 = vpack.c.b16 %v864, %v863
        %v877 = vpack.c.b16 %v866, %v865
        %v878 = vpack.c.b16 %v868, %v867
        %v879 = vpack.c.b16 %v870, %v869
        %v880 = vpack.c.b16 %v872, %v871
        %889 = vmatpush.bf16.msra.mxu0 %v880
        %890 = vmatpush.bf16.msra.mxu0 %v879
        %891 = vmatpush.bf16.msra.mxu0 %v878
        %892 = vmatpush.bf16.msra.mxu0 %v877
        %893 = vmatpush.bf16.msra.mxu0 %v876
        %894 = vmatpush.bf16.msra.mxu0 %v875
        %895 = vmatpush.bf16.msra.mxu0 %v874
        %896 = vmatpush.bf16.msra.mxu0 %v873
        %897 = vmatmul.bf16.gmra.mxu0 %v820
        %v898 = vpop.f32.mrf.mxu0
        %v899 = vadd.f32 %v839, %v898
        %v900 = vpop.f32.mrf.mxu0
        %v901 = vadd.f32 %v839, %v900
        %902 = vdwg.mxu0
        %v903 = vadd.f32 %v899, %v810
        %v904 = vadd.f32 %v901, %v812
        %vm905 = vcmp.gt.f32.partialorder %v903, 0.0
        %vm906 = vcmp.gt.f32.partialorder %v904, 0.0
        %v907 = vmul.f32 %v903, 0.01
        %v908 = vmul.f32 %v904, 0.01
        %v909 = vsel %vm905, %v903, %v907
        %v910 = vsel %vm906, %v904, %v908
        %v911 = vpack.c.bf16 %v910, %v909
        %v912 = vld [vmem:[#allocation13] sm:$0xf]
        %v913 = vld [vmem:[#allocation13 + $0x4] sm:$0xf]
        %v914 = vld [vmem:[#allocation13 + $0x8] sm:$0xf]
        %v915 = vld [vmem:[#allocation13 + $0xc] sm:$0xf]
        %v916 = vld [vmem:[#allocation13 + $0x10] sm:$0xf]
        %v917 = vld [vmem:[#allocation13 + $0x14] sm:$0xf]
        %v918 = vld [vmem:[#allocation13 + $0x18] sm:$0xf]
        %v919 = vld [vmem:[#allocation13 + $0x1c] sm:$0xf]
        %v920 = vld [vmem:[#allocation13 + $0x20] sm:$0xf]
        %v921 = vld [vmem:[#allocation13 + $0x24] sm:$0xf]
        %v922 = vld [vmem:[#allocation13 + $0x28] sm:$0xf]
        %v923 = vld [vmem:[#allocation13 + $0x2c] sm:$0xf]
        %v924 = vld [vmem:[#allocation13 + $0x30] sm:$0xf]
        %v925 = vld [vmem:[#allocation13 + $0x34] sm:$0xf]
        %v926 = vld [vmem:[#allocation13 + $0x38] sm:$0xf]
        %v927 = vld [vmem:[#allocation13 + $0x3c] sm:$0xf]
        %v944 = vunpack.c.l.b16 %v912
        %v945 = vunpack.c.l.b16 %v913
        %v946 = vunpack.c.l.b16 %v914
        %v947 = vunpack.c.l.b16 %v915
        %v948 = vunpack.c.l.b16 %v916
        %v949 = vunpack.c.l.b16 %v917
        %v950 = vunpack.c.l.b16 %v918
        %v951 = vunpack.c.l.b16 %v919
        %v952 = vunpack.c.l.b16 %v920
        %v953 = vunpack.c.l.b16 %v921
        %v954 = vunpack.c.l.b16 %v922
        %v955 = vunpack.c.l.b16 %v923
        %v956 = vunpack.c.l.b16 %v924
        %v957 = vunpack.c.l.b16 %v925
        %v958 = vunpack.c.l.b16 %v926
        %v959 = vunpack.c.l.b16 %v927
        %v960 = vpack.c.b16 %v945, %v944
        %v961 = vpack.c.b16 %v947, %v946
        %v962 = vpack.c.b16 %v949, %v948
        %v963 = vpack.c.b16 %v951, %v950
        %v964 = vpack.c.b16 %v953, %v952
        %v965 = vpack.c.b16 %v955, %v954
        %v966 = vpack.c.b16 %v957, %v956
        %v967 = vpack.c.b16 %v959, %v958
        %976 = vmatpush.bf16.msra.mxu0 %v967
        %977 = vmatpush.bf16.msra.mxu0 %v966
        %978 = vmatpush.bf16.msra.mxu0 %v965
        %979 = vmatpush.bf16.msra.mxu0 %v964
        %980 = vmatpush.bf16.msra.mxu0 %v963
        %981 = vmatpush.bf16.msra.mxu0 %v962
        %982 = vmatpush.bf16.msra.mxu0 %v961
        %983 = vmatpush.bf16.msra.mxu0 %v960
        %984 = vmatmul.bf16.gmra.mxu0 %v911
        %v985 = vpop.f32.mrf.mxu0
        %v986 = vadd.f32 0.0, %v985
        %v987 = vpop.f32.mrf.mxu0
        %v988 = vadd.f32 0.0, %v987
        %989 = vdwg.mxu0
        %990 = vst [vmem:[%s483] sm:$0xff] %v986
        %991 = vst [vmem:[%s483 + $0x8] sm:$0xff] %v988
        %s992 = sand.u32 %s253, 1
        %s993 = scalar_lea.sflag [#allocation4], %s992
        %s994 = sand.u32 %s253, 1
        %s995 = smul.addr %s994, 16
        %s996 = scalar_lea.vmem [#allocation14], %s995
        // Predicated region
        $region89: #{tpu_custom_call.1} parent=59 // pred_check
          %p997 = pneg %p263
        $region90: #{tpu_custom_call.1} parent=59 // pred_check_branch
          %999 = sbr.rel (%p997) target = $region92
        $region91: #{tpu_custom_call.1} parent=59 // pred_region
          %s1000 = smul.u32 2, %s30
          %s1001 = ssub.s32 3, %s1000
          %p1002 = scmp.lt.s32.totalorder %s1001, 2
          %s1003 = scalar_select %p1002, %s1001, 2
          %s1004 = smul.u32 8, %s1003
          %s1005 = ssub.s32 16, %s1004
          %s1006 = sshll.u32 %s1005, 4
          %1007 = vsyncadd %s993, %s1006
          %p1008 = scmp.ne.s32.totalorder 0, %s1004
          %s1009 = smul.addr %s1000, 8
          %s1010 = scalar_lea.hbm %s10, %s1009
          %s1011 = smul.u32 8, %s1003
          %s1012 = sshll.u32 %s996, 4
          %s1013 = int_to_ptr.vmem [resolvable:$true] %s1012
          %s1014 = sshll.u32 %s1010, 4
          %s1015 = int_to_ptr.hbm [resolvable:$true] %s1014
          %s1016 = sshll.u32 %s1011, 4
          %1020 = dma.vmem_to_hbm [thread:$0]  (%p1008), %s1013, %s1016, %s1015, %s993, 128, 128, 8
        $region92: #{tpu_custom_call.1} parent=59 // pred_fallthru
          _
      $region60: #{tpu_custom_call.1} parent=5 // pred_fallthru
        _
      %p1021 = scmp.le.s32.totalorder 2, %s25
      // Predicated region
      $region93: #{tpu_custom_call.1} parent=5 // pred_check
        %p1022 = pneg %p1021
      $region94: #{tpu_custom_call.1} parent=5 // pred_check_branch
        %1024 = sbr.rel (%p1022) target = $region96
      $region95: #{tpu_custom_call.1} parent=5 // pred_region
        %s1025 = ssub.s32 %s25, 2
        // Predicated region
        $region97: #{tpu_custom_call.1} parent=95 // pred_check
          %p1026 = pneg %p269
        $region98: #{tpu_custom_call.1} parent=95 // pred_check_branch
          %1028 = sbr.rel (%p1026) target = $region100
        $region99: #{tpu_custom_call.1} parent=95 // pred_region
          %s1029 = sand.u32 %s254, 1
          %s1030 = scalar_lea.sflag [#allocation4], %s1029
          %s1031 = sand.u32 %s254, 1
          %s1032 = smul.addr %s1031, 16
          %s1033 = scalar_lea.vmem [#allocation14], %s1032
          %1035 = dma.done %s1030, 256
        $region100: #{tpu_custom_call.1} parent=95 // pred_fallthru
          _
      $region96: #{tpu_custom_call.1} parent=5 // pred_fallthru
        _
    $region6: #{tpu_custom_call.1} parent=1 // loop_footer
      %s29 = sadd.s32 1, %s25
    $region7: #{tpu_custom_call.1} parent=1 // loop_footer_branch
      %24 = sbr.rel target = $region3
    $region8: #{tpu_custom_call.1} parent=1 // loop_exit
      _
    %1036 = vsyncpa [#allocation3], 1
    %s1037 = scalar_lea.sflag [#allocation3], 1
    %1038 = vsyncpa %s1037, 1
    %1039 = vsyncpa [#allocation6], 1
    %1040 = vsyncpa [#allocation9], 1
    %1041 = vsyncpa [#allocation12], 1
    %1042 = vsyncpa [#allocation4], 1
    %s1043 = scalar_lea.sflag [#allocation4], 1
    %1044 = vsyncpa %s1043, 1

</llo_original>
